<compile_context>
chip_gen: v7x
topology: tpu7x:2x2x1
jax: 0.10.0
libtpu: 0.0.40
codegen_flags: <defaults>
</compile_context>

<pallas_src>
import math

import jax
import jax.numpy as jnp
from jax.experimental import pallas as pl
from jax.experimental.pallas import tpu as pltpu


def _build_pe(d_model: int, max_seq_length: int, dtype=jnp.float32) -> jnp.ndarray:
    """Deterministic positional-encoding table, identical to the PyTorch __init__."""
    position = jnp.arange(0, max_seq_length, dtype=jnp.float32)[:, None]          # (L, 1)
    div_term = jnp.exp(
        jnp.arange(0, d_model, 2, dtype=jnp.float32) * -(math.log(10000.0) / d_model)
    )                                                                              # (D/2,)
    angles = position * div_term                                                   # (L, D/2)
    pe = jnp.zeros((max_seq_length, d_model), dtype=jnp.float32)
    pe = pe.at[:, 0::2].set(jnp.sin(angles))
    pe = pe.at[:, 1::2].set(jnp.cos(angles))
    return pe[None, :, :].astype(dtype)                                            # (1, L, D)


def _add_pe_kernel(x_ref, pe_ref, o_ref):
    # x_ref : (Bt, St, D) tile of the input
    # pe_ref: (1,  St, D) tile of the pe table (broadcasts over the batch dim)
    o_ref[...] = (x_ref[...] + pe_ref[...]).astype(o_ref.dtype)


def _choose_seq_tile(S: int, D: int, itemsize: int) -> int:
    """Largest sequence tile that (a) respects the sublane quantum, (b) divides S,
    and (c) keeps x+pe+out x 2 double-buffers well under every generation's
    scoped-VMEM limit (v5e's 16 MiB default is the tightest)."""
    sub = max(8, 32 // itemsize)          # 8 rows f32, 16 bf16, 32 int8
    if S <= sub or S % sub != 0:
        # Full-extent block along seq is always legal (no (8,128) constraint).
        return S
    budget_bytes = 12 * 1024 * 1024       # 3 arrays x 2 buffers live at once
    budget_rows = max(sub, budget_bytes // (6 * D * itemsize))
    st = min(S, (budget_rows // sub) * sub)
    st = max(st, sub)
    while S % st != 0:                    # shrink to a divisor of S -> no ragged edges
        st -= sub
    return st


def positional_encoding_forward(x: jnp.ndarray, pe: jnp.ndarray) -> jnp.ndarray:
    """out = x + pe[:, :x.shape[1]]   with x: (B, S, D), pe: (1, L, D), S <= L."""
    B, S, D = x.shape
    assert pe.shape[0] == 1 and pe.shape[2] == D and S <= pe.shape[1]

    itemsize = jnp.dtype(x.dtype).itemsize
    # Pre-slice to the used rows and pre-cast to the activation dtype (pure
    # bandwidth win on a mem-bound add; avoids in-kernel cast on store).
    pe_used = jax.lax.slice_in_dim(pe, 0, S, axis=1).astype(x.dtype)

    compiler_params = pltpu.CompilerParams(
        dimension_semantics=("parallel", "parallel"),
        vmem_limit_bytes=32 * 1024 * 1024,
    )

    total_bytes = B * S * D * itemsize
    if total_bytes <= 2 * 1024 * 1024:
        # Tiny regime: one grid step (one DMA-in, one VPU add, one DMA-out);
        # eliminates the ~0.35 us per-grid-step overhead that dominates here.
        grid_spec = pltpu.PrefetchScalarGridSpec(
            num_scalar_prefetch=0,
            grid=(1, 1),
            in_specs=[
                pl.BlockSpec((B, S, D), lambda s, b: (0, 0, 0)),
                pl.BlockSpec((1, S, D), lambda s, b: (0, 0, 0)),
            ],
            out_specs=pl.BlockSpec((B, S, D), lambda s, b: (0, 0, 0)),
        )
    else:
        St = _choose_seq_tile(S, D, itemsize)
        n_s = S // St  # St divides S (or equals it) by construction
        # Grid ordered (s_tiles, B) with B innermost: pe's block index does not
        # change across consecutive B steps, so Pallas re-uses the resident pe
        # tile instead of re-DMA-ing it B times (up to ~33% less HBM read traffic).
        grid_spec = pltpu.PrefetchScalarGridSpec(
            num_scalar_prefetch=0,
            grid=(n_s, B),
            in_specs=[
                pl.BlockSpec((1, St, D), lambda s, b: (b, s, 0)),
                pl.BlockSpec((1, St, D), lambda s, b: (0, s, 0)),
            ],
            out_specs=pl.BlockSpec((1, St, D), lambda s, b: (b, s, 0)),
        )

    return pl.pallas_call(
        _add_pe_kernel,
        out_shape=jax.ShapeDtypeStruct((B, S, D), x.dtype),
        grid_spec=grid_spec,
        compiler_params=compiler_params,
    )(x, pe_used)


if __name__ == "__main__":
    # Small shapes consistent with the module: d_model=512, max_seq_length=100.
    batch, seq_len = 2, 8
    d_model, max_seq_length = 512, 100

    key = jax.random.PRNGKey(0)
    x = jax.random.normal(key, (batch, seq_len, d_model), dtype=jnp.float32)

    pe = _build_pe(d_model, max_seq_length)

    out = positional_encoding_forward(x, pe)
    out = jax.block_until_ready(out)

    # Reference check (plain JAX) — same semantics as the PyTorch forward.
    ref = x + pe[:, :seq_len].astype(x.dtype)
    assert out.shape == x.shape and out.dtype == x.dtype
    assert jnp.allclose(out, ref, atol=1e-6), "mismatch vs reference"

    print("KERNEL_OK")
</pallas_src>

<mosaic_0001>
module attributes {stable_mosaic.version = 11 : i64} {
  func.func @_add_pe_kernel(%arg0: i32, %arg1: i32, %arg2: memref<2x8x512xf32, #tpu.memory_space<vmem>>, %arg3: memref<1x8x512xf32, #tpu.memory_space<vmem>>, %arg4: memref<2x8x512xf32, #tpu.memory_space<vmem>>) attributes {dimension_semantics = [#tpu.dimension_semantics<parallel>, #tpu.dimension_semantics<parallel>], iteration_bounds = array<i64: 1, 1>, scalar_prefetch = 0 : i64, scratch_operands = 0 : i64, tpu.core_type = #tpu.core_type<tc>, window_params = [{pipeline_mode = #tpu.pipeline_mode<synchronous>, transform_indices = @transform_0, window_bounds = array<i64: 2, 8, 512>}, {pipeline_mode = #tpu.pipeline_mode<synchronous>, transform_indices = @transform_1, window_bounds = array<i64: 1, 8, 512>}, {pipeline_mode = #tpu.pipeline_mode<synchronous>, transform_indices = @transform_2, window_bounds = array<i64: 2, 8, 512>}]} {
    %c0 = arith.constant 0 : index
    %c0_0 = arith.constant 0 : index
    %c0_1 = arith.constant 0 : index
    %0 = vector.load %arg2[%c0, %c0_0, %c0_1] : memref<2x8x512xf32, #tpu.memory_space<vmem>>, vector<2x8x512xf32>
    %c0_2 = arith.constant 0 : index
    %c0_3 = arith.constant 0 : index
    %c0_4 = arith.constant 0 : index
    %1 = vector.load %arg3[%c0_2, %c0_3, %c0_4] : memref<1x8x512xf32, #tpu.memory_space<vmem>>, vector<1x8x512xf32>
    %2 = vector.broadcast %1 : vector<1x8x512xf32> to vector<2x8x512xf32>
    %3 = arith.addf %0, %2 : vector<2x8x512xf32>
    %c0_5 = arith.constant 0 : index
    %c0_6 = arith.constant 0 : index
    %c0_7 = arith.constant 0 : index
    %4 = vector.load %arg4[%c0_5, %c0_6, %c0_7] : memref<2x8x512xf32, #tpu.memory_space<vmem>>, vector<2x8x512xf32>
    tpu.vector_store %arg4[%c0_5, %c0_6, %c0_7], %3 {strides = array<i32>} : memref<2x8x512xf32, #tpu.memory_space<vmem>>, vector<2x8x512xf32>,
    return
  }
  func.func @transform_0(%arg0: i32, %arg1: i32) -> (i32, i32, i32) {
    %c0_i32 = arith.constant 0 : i32
    %c0_i32_0 = arith.constant 0 : i32
    %c0_i32_1 = arith.constant 0 : i32
    %c0_i32_2 = arith.constant 0 : i32
    return %c0_i32, %c0_i32_0, %c0_i32_1 : i32, i32, i32
  }
  func.func @transform_1(%arg0: i32, %arg1: i32) -> (i32, i32, i32) {
    %c0_i32 = arith.constant 0 : i32
    %c0_i32_0 = arith.constant 0 : i32
    %c0_i32_1 = arith.constant 0 : i32
    %c0_i32_2 = arith.constant 0 : i32
    return %c0_i32, %c0_i32_0, %c0_i32_1 : i32, i32, i32
  }
  func.func @transform_2(%arg0: i32, %arg1: i32) -> (i32, i32, i32) {
    %c0_i32 = arith.constant 0 : i32
    %c0_i32_0 = arith.constant 0 : i32
    %c0_i32_1 = arith.constant 0 : i32
    %c0_i32_2 = arith.constant 0 : i32
    return %c0_i32, %c0_i32_0, %c0_i32_1 : i32, i32, i32
  }
}

</mosaic_0001>

<llo_original>
// kernel: tpu_custom_call.1
$region0: #{tpu_custom_call.1}
  #allocation0 [shape = 'u32[]', space=smem, size = 0x4, offset = 0x4, fixed_abs, tag = 'smem constant byte address 0x4 - core index']
  #allocation1 [shape = 'u32[144,128]{1,0:T(1,128)}', space=vmem, size = 0x12000, scoped, tag = 'internal scratch']
  %s0 = inlined_call_operand.hbm [shape: f32[2,8,512], index: 0, kind: input, shape index: {}]
  %s1 = inlined_call_operand.hbm [shape: f32[1,8,512], index: 1, kind: input, shape index: {}]
  %s2 = inlined_call_operand.hbm [shape: f32[2,8,512], index: 2, kind: output, shape index: {}]
  %s3 = sld [smem:[#allocation0]]
  $region26: #{tpu_custom_call.1} parent=0
    _
  %s5 = ssub.s32 1, %s3
  %s6 = scalar_select 0, %s5, %s3
  $region1: #{tpu_custom_call.1} parent=0
    #allocation2 [shape = 'u8[32768]{0}', space=vmem, size = 0x8000, scoped, tag = 'input window, operand 0, single buffered']
    #allocation3 [shape = 's32[1]{0}', space=sflag, size = 0x4, scoped, tag = 'scoped memory for tpu_custom_call.1']
    #allocation4 [shape = 's32[1]{0}', space=sflag, size = 0x4, scoped, tag = 'scoped memory for tpu_custom_call.1']
    #allocation5 [shape = 'u8[16384]{0}', space=vmem, size = 0x4000, scoped, tag = 'input window, operand 1, single buffered']
    #allocation6 [shape = 's32[1]{0}', space=sflag, size = 0x4, scoped, tag = 'scoped memory for tpu_custom_call.1']
    #allocation7 [shape = 'u8[32768]{0}', space=vmem, size = 0x8000, scoped, tag = 'output window, operand 0, single buffered']
    %7 = vsyncpa [#allocation3], 0
    %8 = vsyncpa [#allocation6], 0
    %9 = vsyncpa [#allocation4], 0
    // Predicated region
    $region2: #{tpu_custom_call.1} parent=1 // pred_check
      _
    $region3: #{tpu_custom_call.1} parent=1 // pred_check_branch
      %11 = sbr.rel (0) target = $region5
    $region4: #{tpu_custom_call.1} parent=1 // pred_region
      %s13 = ssub.s32 1024, 1024
      %14 = vsyncadd [#allocation3], %s13
      %s15 = sshll.u32 [#allocation2], 4
      %s16 = int_to_ptr.vmem [resolvable:$true] %s15
      %21 = dma.hbm_to_vmem [thread:$0]  %s0, 1024, %s16, [#allocation3], 512, 512, 32
    $region5: #{tpu_custom_call.1} parent=1 // pred_fallthru
      _
    // Predicated region
    $region6: #{tpu_custom_call.1} parent=1 // pred_check
      _
    $region7: #{tpu_custom_call.1} parent=1 // pred_check_branch
      %23 = sbr.rel (0) target = $region9
    $region8: #{tpu_custom_call.1} parent=1 // pred_region
      %s25 = ssub.s32 512, 512
      %26 = vsyncadd [#allocation6], %s25
      %s28 = sshll.u32 [#allocation5], 4
      %s29 = int_to_ptr.vmem [resolvable:$true] %s28
      %31 = dma.hbm_to_vmem [thread:$0]  %s1, 512, %s29, [#allocation6]
    $region9: #{tpu_custom_call.1} parent=1 // pred_fallthru
      _
    // Predicated region
    $region10: #{tpu_custom_call.1} parent=1 // pred_check
      _
    $region11: #{tpu_custom_call.1} parent=1 // pred_check_branch
      %33 = sbr.rel (0) target = $region13
    $region12: #{tpu_custom_call.1} parent=1 // pred_region
      %34 = dma.done [#allocation3], 1024
    $region13: #{tpu_custom_call.1} parent=1 // pred_fallthru
      _
    // Predicated region
    $region14: #{tpu_custom_call.1} parent=1 // pred_check
      _
    $region15: #{tpu_custom_call.1} parent=1 // pred_check_branch
      %36 = sbr.rel (0) target = $region17
    $region16: #{tpu_custom_call.1} parent=1 // pred_region
      %37 = dma.done [#allocation6], 512
    $region17: #{tpu_custom_call.1} parent=1 // pred_fallthru
      _
    %v38 = vld [vmem:[#allocation2] sm:$0xff]
    %v39 = vld [vmem:[#allocation2 + $0x8] sm:$0xff]
    %v40 = vld [vmem:[#allocation2 + $0x10] sm:$0xff]
    %v41 = vld [vmem:[#allocation2 + $0x18] sm:$0xff]
    %v42 = vld [vmem:[#allocation2 + $0x20] sm:$0xff]
    %v43 = vld [vmem:[#allocation2 + $0x28] sm:$0xff]
    %v44 = vld [vmem:[#allocation2 + $0x30] sm:$0xff]
    %v45 = vld [vmem:[#allocation2 + $0x38] sm:$0xff]
    %v46 = vld [vmem:[#allocation5] sm:$0xff]
    %v47 = vld [vmem:[#allocation5 + $0x8] sm:$0xff]
    %v48 = vld [vmem:[#allocation5 + $0x10] sm:$0xff]
    %v49 = vld [vmem:[#allocation5 + $0x18] sm:$0xff]
    %v50 = vadd.f32 %v38, %v46
    %v51 = vadd.f32 %v39, %v47
    %v52 = vadd.f32 %v40, %v48
    %v53 = vadd.f32 %v41, %v49
    %v54 = vadd.f32 %v42, %v46
    %v55 = vadd.f32 %v43, %v47
    %v56 = vadd.f32 %v44, %v48
    %v57 = vadd.f32 %v45, %v49
    %58 = vst [vmem:[#allocation7] sm:$0xff] %v50
    %59 = vst [vmem:[#allocation7 + $0x8] sm:$0xff] %v51
    %60 = vst [vmem:[#allocation7 + $0x10] sm:$0xff] %v52
    %61 = vst [vmem:[#allocation7 + $0x18] sm:$0xff] %v53
    %62 = vst [vmem:[#allocation7 + $0x20] sm:$0xff] %v54
    %63 = vst [vmem:[#allocation7 + $0x28] sm:$0xff] %v55
    %64 = vst [vmem:[#allocation7 + $0x30] sm:$0xff] %v56
    %65 = vst [vmem:[#allocation7 + $0x38] sm:$0xff] %v57
    // Predicated region
    $region18: #{tpu_custom_call.1} parent=1 // pred_check
      _
    $region19: #{tpu_custom_call.1} parent=1 // pred_check_branch
      %67 = sbr.rel (0) target = $region21
    $region20: #{tpu_custom_call.1} parent=1 // pred_region
      %s69 = ssub.s32 1024, 1024
      %70 = vsyncadd [#allocation4], %s69
      %s71 = sshll.u32 [#allocation7], 4
      %s72 = int_to_ptr.vmem [resolvable:$true] %s71
      %77 = dma.vmem_to_hbm [thread:$0]  %s72, 1024, %s2, [#allocation4], 512, 512, 32
    $region21: #{tpu_custom_call.1} parent=1 // pred_fallthru
      _
    // Predicated region
    $region22: #{tpu_custom_call.1} parent=1 // pred_check
      _
    $region23: #{tpu_custom_call.1} parent=1 // pred_check_branch
      %79 = sbr.rel (0) target = $region25
    $region24: #{tpu_custom_call.1} parent=1 // pred_region
      %80 = dma.done [#allocation4], 1024
    $region25: #{tpu_custom_call.1} parent=1 // pred_fallthru
      _
    %81 = vsyncpa [#allocation3], 1
    %82 = vsyncpa [#allocation6], 1
    %83 = vsyncpa [#allocation4], 1

</llo_original>
